<compile_context>
chip_gen: v6e
topology: v6e:2x2x1
jax: 0.10.0
libtpu: 0.0.40
codegen_flags: <defaults>
</compile_context>

<pallas_src>
import functools

import jax
import jax.numpy as jnp
import numpy as np
from jax.experimental import pallas as pl
from jax.experimental.pallas import tpu as pltpu

LN_EPS = 1e-5  # PyTorch nn.LayerNorm default

_PARALLEL_1D = pltpu.CompilerParams(dimension_semantics=("parallel",))


def _row_tile(m):
    # One row-tile over the flattened (batch*seq) axis.  Full extent when small
    # (all test shapes); 256 rows (multiple of 8 sublanes) otherwise.
    return m if m <= 512 else 256


# ----------------------------------------------------------------------------
# LayerNorm (+ fused projection) kernels
# ----------------------------------------------------------------------------
def _layernorm_kernel(x_ref, g_ref, b_ref, o_ref):
    x = x_ref[...]
    mean = jnp.mean(x, axis=-1, keepdims=True)
    xc = x - mean
    var = jnp.mean(xc * xc, axis=-1, keepdims=True)
    o_ref[...] = xc * jax.lax.rsqrt(var + LN_EPS) * g_ref[...] + b_ref[...]


def layernorm(x, gamma, beta):
    B, S, D = x.shape
    M = B * S
    tm = _row_tile(M)
    out = pl.pallas_call(
        _layernorm_kernel,
        out_shape=jax.ShapeDtypeStruct((M, D), jnp.float32),
        grid=(pl.cdiv(M, tm),),
        in_specs=[
            pl.BlockSpec((tm, D), lambda i: (i, 0)),
            pl.BlockSpec((1, D), lambda i: (0, 0)),
            pl.BlockSpec((1, D), lambda i: (0, 0)),
        ],
        out_specs=pl.BlockSpec((tm, D), lambda i: (i, 0)),
        compiler_params=_PARALLEL_1D,
    )(x.reshape(M, D), gamma.reshape(1, D), beta.reshape(1, D))
    return out.reshape(B, S, D)


def _ln_proj_kernel(x_ref, g_ref, b_ref, w_ref, bias_ref, nx_ref, y_ref):
    x = x_ref[...]                                       # (tm, D) f32
    mean = jnp.mean(x, axis=-1, keepdims=True)
    xc = x - mean
    var = jnp.mean(xc * xc, axis=-1, keepdims=True)
    nx = xc * jax.lax.rsqrt(var + LN_EPS) * g_ref[...] + b_ref[...]
    nx_ref[...] = nx
    y_ref[...] = jnp.dot(nx.astype(jnp.bfloat16), w_ref[...],
                         preferred_element_type=jnp.float32) + bias_ref[...]


def ln_proj(x, gamma, beta, w_t, bias):
    """Fused y = LayerNorm(x) @ w_t + bias.  Returns (LN(x), y)."""
    B, S, D = x.shape
    Dout = w_t.shape[1]
    M = B * S
    tm = _row_tile(M)
    nx, y = pl.pallas_call(
        _ln_proj_kernel,
        out_shape=(jax.ShapeDtypeStruct((M, D), jnp.float32),
                   jax.ShapeDtypeStruct((M, Dout), jnp.float32)),
        grid=(pl.cdiv(M, tm),),
        in_specs=[
            pl.BlockSpec((tm, D), lambda i: (i, 0)),
            pl.BlockSpec((1, D), lambda i: (0, 0)),
            pl.BlockSpec((1, D), lambda i: (0, 0)),
            pl.BlockSpec((D, Dout), lambda i: (0, 0)),
            pl.BlockSpec((1, Dout), lambda i: (0, 0)),
        ],
        out_specs=(pl.BlockSpec((tm, D), lambda i: (i, 0)),
                   pl.BlockSpec((tm, Dout), lambda i: (i, 0))),
        compiler_params=_PARALLEL_1D,
    )(x.reshape(M, D), gamma.reshape(1, D), beta.reshape(1, D), w_t,
      bias.reshape(1, Dout))
    return nx.reshape(B, S, D), y.reshape(B, S, Dout)


# ----------------------------------------------------------------------------
# Linear: bf16 MXU matmul, optional ReLU, optional fused residual add
# ----------------------------------------------------------------------------
def _linear_kernel(*refs, relu, has_res):
    if has_res:
        x_ref, w_ref, b_ref, res_ref, o_ref = refs
    else:
        x_ref, w_ref, b_ref, o_ref = refs
    y = jnp.dot(x_ref[...].astype(jnp.bfloat16), w_ref[...],
                preferred_element_type=jnp.float32) + b_ref[...]
    if relu:
        y = jnp.maximum(y, 0.0)
    if has_res:
        y = y + res_ref[...]
    o_ref[...] = y


def linear(x, w_t, bias, residual=None, relu=False):
    """x: (B,S,Din) f32; w_t: (Din,Dout) bf16 (pre-transposed); bias: (Dout,)."""
    B, S, Din = x.shape
    Dout = w_t.shape[1]
    M = B * S
    tm = _row_tile(M)
    args = [x.reshape(M, Din), w_t, bias.reshape(1, Dout)]
    in_specs = [
        pl.BlockSpec((tm, Din), lambda i: (i, 0)),
        pl.BlockSpec((Din, Dout), lambda i: (0, 0)),
        pl.BlockSpec((1, Dout), lambda i: (0, 0)),
    ]
    if residual is not None:
        args.append(residual.reshape(M, Dout))
        in_specs.append(pl.BlockSpec((tm, Dout), lambda i: (i, 0)))
    kernel = functools.partial(_linear_kernel, relu=relu,
                               has_res=residual is not None)
    y = pl.pallas_call(
        kernel,
        out_shape=jax.ShapeDtypeStruct((M, Dout), jnp.float32),
        grid=(pl.cdiv(M, tm),),
        in_specs=in_specs,
        out_specs=pl.BlockSpec((tm, Dout), lambda i: (i, 0)),
        compiler_params=_PARALLEL_1D,
    )(*args)
    return y.reshape(B, S, Dout)


# ----------------------------------------------------------------------------
# Relative attention kernels
# ----------------------------------------------------------------------------
def _rel_bd_kernel(qkv_ref, p_ref, vb_ref, bd_ref, *, H):
    D3 = qkv_ref.shape[-1]
    D = D3 // 3
    dh = D // H
    q = qkv_ref[0]                                       # (Sm, 3D); q is [:, :D]
    p = p_ref[0]                                         # (Sp, D)
    vb = vb_ref[...]                                     # (1, dh)
    for h in range(H):
        qh = (q[:, h * dh:(h + 1) * dh] + vb).astype(jnp.bfloat16)
        ph = p[:, h * dh:(h + 1) * dh].astype(jnp.bfloat16)
        # contract the last axes directly (rhs "transposed") - no XLU .T
        bd_ref[0, h] = jax.lax.dot_general(
            qh, ph, (((1,), (1,)), ((), ())),
            preferred_element_type=jnp.float32)


def rel_bd(qkv, pos, v_bias, H):
    B, Sm, D3 = qkv.shape
    D = D3 // 3
    dh = D // H
    Sp = pos.shape[1]
    kernel = functools.partial(_rel_bd_kernel, H=H)
    return pl.pallas_call(
        kernel,
        out_shape=jax.ShapeDtypeStruct((B, H, Sm, Sp), jnp.float32),
        grid=(B,),
        in_specs=[
            pl.BlockSpec((1, Sm, D3), lambda i: (i, 0, 0)),
            pl.BlockSpec((1, Sp, D), lambda i: (i, 0, 0)),
            pl.BlockSpec((1, dh), lambda i: (0, 0)),
        ],
        out_specs=pl.BlockSpec((1, H, Sm, Sp), lambda i: (i, 0, 0, 0)),
        compiler_params=_PARALLEL_1D,
    )(qkv, pos, v_bias.reshape(1, dh))


def _rel_attn_kernel(*refs, H, scale, has_mask):
    if has_mask:
        qkv_ref, bd_ref, u_ref, m_ref, o_ref = refs
    else:
        qkv_ref, bd_ref, u_ref, o_ref = refs
    D3 = qkv_ref.shape[-1]
    D = D3 // 3
    dh = D // H
    qkv = qkv_ref[0]                                     # (Sm, 3D)
    u = u_ref[...]                                       # (1, dh)
    for h in range(H):
        qh = (qkv[:, h * dh:(h + 1) * dh] + u).astype(jnp.bfloat16)
        kh = qkv[:, D + h * dh:D + (h + 1) * dh].astype(jnp.bfloat16)
        vh = qkv[:, 2 * D + h * dh:2 * D + (h + 1) * dh].astype(jnp.bfloat16)
        ac = jax.lax.dot_general(qh, kh, (((1,), (1,)), ((), ())),
                                 preferred_element_type=jnp.float32)
        att = (ac + bd_ref[0, h]) * scale                # f32 scores
        if has_mask:
            att = jnp.where(m_ref[0, h] != 0, -1000000000000.0, att)
        att = att - jnp.max(att, axis=-1, keepdims=True)
        p = jnp.exp(att)
        p = p * pl.reciprocal(jnp.sum(p, axis=-1, keepdims=True), approx=True)
        out_h = jnp.dot(p.astype(jnp.bfloat16), vh,
                        preferred_element_type=jnp.float32)
        # merge heads in-VMEM: write each head into its feature slice
        o_ref[0, :, h * dh:(h + 1) * dh] = out_h


def rel_attention(qkv, bd, u_bias, scale, H, mask=None):
    B, Sm, D3 = qkv.shape
    D = D3 // 3
    dh = D // H
    has_mask = mask is not None
    args = [qkv, bd, u_bias.reshape(1, dh)]
    in_specs = [
        pl.BlockSpec((1, Sm, D3), lambda i: (i, 0, 0)),
        pl.BlockSpec((1, H, Sm, Sm), lambda i: (i, 0, 0, 0)),
        pl.BlockSpec((1, dh), lambda i: (0, 0)),
    ]
    if has_mask:
        args.append(mask)                                # (B, H, Sm, Sm)
        in_specs.append(pl.BlockSpec((1, H, Sm, Sm), lambda i: (i, 0, 0, 0)))
    kernel = functools.partial(_rel_attn_kernel, H=H, scale=scale,
                               has_mask=has_mask)
    return pl.pallas_call(
        kernel,
        out_shape=jax.ShapeDtypeStruct((B, Sm, D), jnp.float32),
        grid=(B,),
        in_specs=in_specs,
        out_specs=pl.BlockSpec((1, Sm, D), lambda i: (i, 0, 0)),
        compiler_params=_PARALLEL_1D,
    )(*args)


# ----------------------------------------------------------------------------
# Cross attention (nn.MultiheadAttention math, batch_first)
# ----------------------------------------------------------------------------
def _cross_attn_kernel(*refs, H, scale, has_mask):
    if has_mask:
        q_ref, kv_ref, m_ref, o_ref = refs
    else:
        q_ref, kv_ref, o_ref = refs
    D = q_ref.shape[-1]
    dh = D // H
    q = q_ref[0]                                         # (Sq, D)
    kv = kv_ref[0]                                       # (Sk, 2D)
    for h in range(H):
        qh = q[:, h * dh:(h + 1) * dh].astype(jnp.bfloat16)
        kh = kv[:, h * dh:(h + 1) * dh].astype(jnp.bfloat16)
        vh = kv[:, D + h * dh:D + (h + 1) * dh].astype(jnp.bfloat16)
        s = jax.lax.dot_general(qh, kh, (((1,), (1,)), ((), ())),
                                preferred_element_type=jnp.float32) * scale
        if has_mask:
            s = s + m_ref[0, h]                          # additive attn_mask
        s = s - jnp.max(s, axis=-1, keepdims=True)
        p = jnp.exp(s)
        p = p * pl.reciprocal(jnp.sum(p, axis=-1, keepdims=True), approx=True)
        out_h = jnp.dot(p.astype(jnp.bfloat16), vh,
                        preferred_element_type=jnp.float32)
        o_ref[0, :, h * dh:(h + 1) * dh] = out_h


def cross_attention(q, kv, scale, H, bias=None):
    B, Sq, D = q.shape
    Sk = kv.shape[1]
    has_mask = bias is not None
    args = [q, kv]
    in_specs = [
        pl.BlockSpec((1, Sq, D), lambda i: (i, 0, 0)),
        pl.BlockSpec((1, Sk, 2 * D), lambda i: (i, 0, 0)),
    ]
    if has_mask:
        args.append(bias)                                # (B, H, Sq, Sk)
        in_specs.append(pl.BlockSpec((1, H, Sq, Sk), lambda i: (i, 0, 0, 0)))
    kernel = functools.partial(_cross_attn_kernel, H=H, scale=scale,
                               has_mask=has_mask)
    return pl.pallas_call(
        kernel,
        out_shape=jax.ShapeDtypeStruct((B, Sq, D), jnp.float32),
        grid=(B,),
        in_specs=in_specs,
        out_specs=pl.BlockSpec((1, Sq, D), lambda i: (i, 0, 0)),
        compiler_params=_PARALLEL_1D,
    )(*args)


# ----------------------------------------------------------------------------
# ln3 + FFN(ReLU) + residual, fully fused (the (tm, DFF) intermediate stays in
# VMEM, never written to HBM)
# ----------------------------------------------------------------------------
def _ln_ffn_kernel(x_ref, g_ref, b_ref, w1_ref, b1_ref, w2_ref, b2_ref, o_ref):
    x = x_ref[...]
    mean = jnp.mean(x, axis=-1, keepdims=True)
    xc = x - mean
    var = jnp.mean(xc * xc, axis=-1, keepdims=True)
    lv = xc * jax.lax.rsqrt(var + LN_EPS) * g_ref[...] + b_ref[...]
    h = jnp.dot(lv.astype(jnp.bfloat16), w1_ref[...],
                preferred_element_type=jnp.float32) + b1_ref[...]
    h = jnp.maximum(h, 0.0)
    y = jnp.dot(h.astype(jnp.bfloat16), w2_ref[...],
                preferred_element_type=jnp.float32) + b2_ref[...]
    o_ref[...] = lv + y


def ln_ffn(x, gamma, beta, w1_t, b1, w2_t, b2):
    B, S, D = x.shape
    DFF = w1_t.shape[1]
    M = B * S
    tm = _row_tile(M)
    out = pl.pallas_call(
        _ln_ffn_kernel,
        out_shape=jax.ShapeDtypeStruct((M, D), jnp.float32),
        grid=(pl.cdiv(M, tm),),
        in_specs=[
            pl.BlockSpec((tm, D), lambda i: (i, 0)),
            pl.BlockSpec((1, D), lambda i: (0, 0)),
            pl.BlockSpec((1, D), lambda i: (0, 0)),
            pl.BlockSpec((D, DFF), lambda i: (0, 0)),
            pl.BlockSpec((1, DFF), lambda i: (0, 0)),
            pl.BlockSpec((DFF, D), lambda i: (0, 0)),
            pl.BlockSpec((1, D), lambda i: (0, 0)),
        ],
        out_specs=pl.BlockSpec((tm, D), lambda i: (i, 0)),
        compiler_params=_PARALLEL_1D,
    )(x.reshape(M, D), gamma.reshape(1, D), beta.reshape(1, D),
      w1_t, b1.reshape(1, DFF), w2_t, b2.reshape(1, D))
    return out.reshape(B, S, D)


# ----------------------------------------------------------------------------
# Plain-JAX glue: head helpers (reference only) and the XL shift trick
# ----------------------------------------------------------------------------
def split_heads(x, H):
    B, S, D = x.shape
    x = x.reshape(B, S, H, D // H).transpose(0, 2, 1, 3)
    return x.reshape(B * H, S, D // H)


def merge_heads(x, H):
    BH, S, dh = x.shape
    x = x.reshape(BH // H, H, S, dh).transpose(0, 2, 1, 3)
    return x.reshape(BH // H, S, H * dh)


def rel_shift(t):
    """Exact replica of `shift(t)` in the PyTorch code. t: (N, A, B) -> (N, B, A)."""
    N, A, Bd = t.shape
    pad = jnp.zeros((N, A, 1), t.dtype)
    t = jnp.concatenate([pad, t], axis=-1)               # (N, A, B+1)
    t = t.reshape(N, Bd + 1, A)                          # contiguous reinterpret (.view)
    return t[:, 1:, :]                                   # (N, B, A)


# ----------------------------------------------------------------------------
# Forward pass
# ----------------------------------------------------------------------------
def decoder_layer_forward(p, x, y, u, v, pos, mem=None, mask1=None, mask2=None):
    H = p["num_heads"]
    B, S, D = x.shape
    dh = D // H

    # ---- ln1 fused with the QKV projection ----------------------------------
    if mem is None:
        nx, qkv = ln_proj(x, p["ln1_g"], p["ln1_b"],
                          p["rel_qkv_wT"], p["rel_qkv_b"])
    else:
        nx = layernorm(x, p["ln1_g"], p["ln1_b"])
        mememb = jnp.concatenate([mem, nx], axis=1)
        qkv = linear(mememb, p["rel_qkv_wT"], p["rel_qkv_b"])
    Sm = qkv.shape[1]

    # ---- relative-position scores + XL shift (shift stays in JAX) ----------
    bd = rel_bd(qkv, pos, v, H)                          # (B, H, Sm, Sp)
    Sp = bd.shape[-1]
    bd = rel_shift(bd.reshape(B * H, Sm, Sp)).reshape(B, H, Sp, Sm)

    m1 = None
    if mask1 is not None:
        m1 = jnp.broadcast_to(mask1, (B * H, Sm, Sm)).astype(
            jnp.float32).reshape(B, H, Sm, Sm)

    attn = rel_attention(qkv, bd, u, 1.0 / (D ** 0.5), H, mask=m1)  # (B, Sm, D)

    # cw is position-wise, so slicing to the last S rows before it is identical
    # to cw(out)[:, -S:, :]; the residual add is fused into the projection.
    av = linear(attn[:, -S:, :], p["rel_cw_wT"], p["rel_cw_b"], residual=nx)

    # ---- ln2 fused with the cross-attention Q projection --------------------
    no, q2 = ln_proj(av, p["ln2_g"], p["ln2_b"], p["ca_q_wT"], p["ca_q_b"])
    kv = linear(y, p["ca_kv_wT"], p["ca_kv_b"])          # (B, Sy, 2D) fused K|V

    bias2 = None
    if mask2 is not None:
        m2 = mask2
        if m2.dtype == jnp.bool_:
            # finite large-negative instead of -inf to avoid NaN on fully
            # masked rows (same softmax result for any realizable mask)
            m2 = jnp.where(m2, -1e30, 0.0)
        bias2 = jnp.broadcast_to(m2, (B * H, S, kv.shape[1] // 1)).astype(
            jnp.float32).reshape(B, H, S, kv.shape[1])

    atv = cross_attention(q2, kv, 1.0 / (dh ** 0.5), H, bias=bias2)  # (B, S, D)
    fv = linear(atv, p["ca_out_wT"], p["ca_out_b"], residual=no)

    # ---- ln3 + FFN + final residual, fully fused -----------------------------
    return ln_ffn(fv, p["ln3_g"], p["ln3_b"],
                  p["ff1_wT"], p["ff1_b"], p["ff2_wT"], p["ff2_b"])


# ----------------------------------------------------------------------------
# Parameter setup
# ----------------------------------------------------------------------------
def init_params(key, d_model, num_heads, dff):
    ks = iter(jax.random.split(key, 40))

    def lin_init(dout, din):
        w = jax.random.normal(next(ks), (dout, din), jnp.float32) / np.sqrt(din)
        b = jax.random.normal(next(ks), (dout,), jnp.float32) * 0.02
        return w, b

    p = {"num_heads": num_heads}
    for name in ("ln1", "ln2", "ln3"):
        p[f"{name}_g"] = jnp.ones((d_model,), jnp.float32)
        p[f"{name}_b"] = jnp.zeros((d_model,), jnp.float32)
    for name in ("rel_qw", "rel_kw", "rel_vw", "rel_cw"):
        p[f"{name}_w"], p[f"{name}_b"] = lin_init(d_model, d_model)
    wq, bq = lin_init(d_model, d_model)
    wk, bk = lin_init(d_model, d_model)
    wv, bv = lin_init(d_model, d_model)
    p["ca_in_w"] = jnp.concatenate([wq, wk, wv], axis=0)   # (3D, D), PyTorch layout
    p["ca_in_b"] = jnp.concatenate([bq, bk, bv], axis=0)
    p["ca_out_w"], p["ca_out_b"] = lin_init(d_model, d_model)
    p["ff1_w"], p["ff1_b"] = lin_init(dff, d_model)
    p["ff2_w"], p["ff2_b"] = lin_init(d_model, dff)
    return p


def prepare_params(params):
    """One-time prep: transpose PyTorch-layout weights to (Din, Dout) and cast
    to bf16 for the MXU; fuse Q|K|V and K|V weight matrices."""
    def t_bf16(w):
        return jnp.transpose(w).astype(jnp.bfloat16)

    p = {"num_heads": params["num_heads"]}
    for n in ("ln1", "ln2", "ln3"):
        p[f"{n}_g"] = params[f"{n}_g"]
        p[f"{n}_b"] = params[f"{n}_b"]

    p["rel_qkv_wT"] = jnp.concatenate(
        [t_bf16(params["rel_qw_w"]), t_bf16(params["rel_kw_w"]),
         t_bf16(params["rel_vw_w"])], axis=1)               # (D, 3D) bf16
    p["rel_qkv_b"] = jnp.concatenate(
        [params["rel_qw_b"], params["rel_kw_b"], params["rel_vw_b"]])
    p["rel_cw_wT"] = t_bf16(params["rel_cw_w"])
    p["rel_cw_b"] = params["rel_cw_b"]

    Wq, Wk, Wv = jnp.split(params["ca_in_w"], 3, axis=0)
    bq, bk, bv = jnp.split(params["ca_in_b"], 3, axis=0)
    p["ca_q_wT"] = jnp.transpose(Wq).astype(jnp.bfloat16)
    p["ca_q_b"] = bq
    p["ca_kv_wT"] = jnp.concatenate(
        [jnp.transpose(Wk), jnp.transpose(Wv)], axis=1).astype(jnp.bfloat16)
    p["ca_kv_b"] = jnp.concatenate([bk, bv])
    p["ca_out_wT"] = t_bf16(params["ca_out_w"])
    p["ca_out_b"] = params["ca_out_b"]

    p["ff1_wT"] = t_bf16(params["ff1_w"])
    p["ff1_b"] = params["ff1_b"]
    p["ff2_wT"] = t_bf16(params["ff2_w"])
    p["ff2_b"] = params["ff2_b"]
    return p


# ----------------------------------------------------------------------------
# Pure-JAX reference (cast_bf16=True mirrors the kernel's bf16 MXU operands)
# ----------------------------------------------------------------------------
def reference_forward(params, x, y, u, v, pos, mem=None, mask1=None,
                      mask2=None, *, cast_bf16=False):
    PR = jax.lax.Precision.HIGHEST
    H = params["num_heads"]
    B, S, D = x.shape
    dh = D // H

    def mm(t):
        return t.astype(jnp.bfloat16).astype(jnp.float32) if cast_bf16 else t

    def ln(t, g, b):
        m = jnp.mean(t, axis=-1, keepdims=True)
        var = jnp.mean((t - m) ** 2, axis=-1, keepdims=True)
        return (t - m) * jax.lax.rsqrt(var + LN_EPS) * g + b

    def lin(t, w, b):
        return jnp.einsum("bsd,od->bso", mm(t), mm(w), precision=PR) + b

    nx = ln(x, params["ln1_g"], params["ln1_b"])
    mememb = nx if mem is None else jnp.concatenate([mem, nx], axis=1)
    qh = split_heads(lin(mememb, params["rel_qw_w"], params["rel_qw_b"]), H)
    kh = split_heads(lin(mememb, params["rel_kw_w"], params["rel_kw_b"]), H)
    vh = split_heads(lin(mememb, params["rel_vw_w"], params["rel_vw_b"]), H)
    ph = split_heads(pos, H)
    ac = jnp.einsum("ijk,imk->ijm", mm(qh + u), mm(kh), precision=PR)
    bd = jnp.einsum("ijk,ilk->ijl", mm(qh + v), mm(ph), precision=PR)
    bd = rel_shift(bd)
    att = (ac + bd) * (1.0 / D ** 0.5)
    if mask1 is not None:
        att = jnp.where(jnp.broadcast_to(mask1, att.shape) != 0, -1e12, att)
    att = jax.nn.softmax(att, axis=-1)
    out = jnp.einsum("ijk,ikd->ijd", mm(att), mm(vh), precision=PR)
    rl = lin(merge_heads(out, H), params["rel_cw_w"], params["rel_cw_b"])
    av = nx + rl[:, -S:, :]
    no = ln(av, params["ln2_g"], params["ln2_b"])

    Wq, Wk, Wv = jnp.split(params["ca_in_w"], 3, axis=0)
    bq, bk, bv = jnp.split(params["ca_in_b"], 3, axis=0)
    q2 = split_heads(lin(no, Wq, bq), H)
    k2 = split_heads(lin(y, Wk, bk), H)
    v2 = split_heads(lin(y, Wv, bv), H)
    s2 = jnp.einsum("ijk,imk->ijm", mm(q2), mm(k2), precision=PR) * (1.0 / dh ** 0.5)
    if mask2 is not None:
        m2 = mask2
        if m2.dtype == jnp.bool_:
            m2 = jnp.where(m2, -1e30, 0.0)
        s2 = s2 + jnp.broadcast_to(m2, s2.shape)
    p2 = jax.nn.softmax(s2, axis=-1)
    atv = merge_heads(jnp.einsum("ijk,ikd->ijd", mm(p2), mm(v2), precision=PR), H)
    atv = lin(atv, params["ca_out_w"], params["ca_out_b"])
    fv = no + atv
    lv = ln(fv, params["ln3_g"], params["ln3_b"])
    hdd = jnp.maximum(lin(lv, params["ff1_w"], params["ff1_b"]), 0.0)
    return lv + lin(hdd, params["ff2_w"], params["ff2_b"])


if __name__ == "__main__":
    B, S, Sy, D, H, DFF = 2, 8, 16, 32, 4, 64
    dh = D // H

    key = jax.random.PRNGKey(0)
    k_param, kx, ky, ku, kv, kpos = jax.random.split(key, 6)
    params = init_params(k_param, D, H, DFF)
    prepared = prepare_params(params)

    x = jax.random.normal(kx, (B, S, D), jnp.float32)
    y = jax.random.normal(ky, (B, Sy, D), jnp.float32)
    u = jax.random.normal(ku, (dh,), jnp.float32) * 0.1
    v = jax.random.normal(kv, (dh,), jnp.float32) * 0.1
    pos = jax.random.normal(kpos, (B, S, D), jnp.float32)

    out = decoder_layer_forward(prepared, x, y, u, v, pos, mem=None,
                                mask1=None, mask2=None)
    out = jax.block_until_ready(out)
    assert out.shape == (B, S, D), out.shape

    # Structural check vs a reference that applies the same bf16 MXU-operand
    # casts (tight), plus a loose sanity check vs pure-f32 math.
    ref_bf16 = jax.block_until_ready(
        reference_forward(params, x, y, u, v, pos, cast_bf16=True))
    ref_f32 = jax.block_until_ready(
        reference_forward(params, x, y, u, v, pos, cast_bf16=False))
    np.testing.assert_allclose(np.asarray(out), np.asarray(ref_bf16),
                               atol=2e-2, rtol=2e-2)
    np.testing.assert_allclose(np.asarray(out), np.asarray(ref_f32),
                               atol=1.5e-1, rtol=1.5e-1)
    print("KERNEL_OK")
</pallas_src>

<mosaic_0001>
module attributes {stable_mosaic.version = 11 : i64} {
  func.func @_ln_proj_kernel(%arg0: i32, %arg1: memref<16x32xf32, #tpu.memory_space<vmem>>, %arg2: memref<1x32xf32, #tpu.memory_space<vmem>>, %arg3: memref<1x32xf32, #tpu.memory_space<vmem>>, %arg4: memref<32x96xbf16, #tpu.memory_space<vmem>>, %arg5: memref<1x96xf32, #tpu.memory_space<vmem>>, %arg6: memref<16x32xf32, #tpu.memory_space<vmem>>, %arg7: memref<16x96xf32, #tpu.memory_space<vmem>>) attributes {dimension_semantics = [#tpu.dimension_semantics<parallel>], iteration_bounds = array<i64: 1>, scalar_prefetch = 0 : i64, scratch_operands = 0 : i64, tpu.core_type = #tpu.core_type<tc>, window_params = [{transform_indices = @transform_0, window_bounds = array<i64: 16, 32>}, {pipeline_mode = #tpu.pipeline_mode<synchronous>, transform_indices = @transform_1, window_bounds = array<i64: 1, 32>}, {pipeline_mode = #tpu.pipeline_mode<synchronous>, transform_indices = @transform_2, window_bounds = array<i64: 1, 32>}, {pipeline_mode = #tpu.pipeline_mode<synchronous>, transform_indices = @transform_3, window_bounds = array<i64: 32, 96>}, {pipeline_mode = #tpu.pipeline_mode<synchronous>, transform_indices = @transform_4, window_bounds = array<i64: 1, 96>}, {transform_indices = @transform_5, window_bounds = array<i64: 16, 32>}, {transform_indices = @transform_6, window_bounds = array<i64: 16, 96>}]} {
    %c0 = arith.constant 0 : index
    %c0_0 = arith.constant 0 : index
    %0 = vector.load %arg1[%c0, %c0_0] : memref<16x32xf32, #tpu.memory_space<vmem>>, vector<16x32xf32>
    %cst = arith.constant dense<0.000000e+00> : vector<16xf32>
    %1 = vector.multi_reduction <add>, %0, %cst [1] : vector<16x32xf32> to vector<16xf32>
    %2 = vector.shape_cast %1 : vector<16xf32> to vector<16x1xf32>
    %cst_1 = arith.constant 3.200000e+01 : f32
    %3 = vector.broadcast %cst_1 : f32 to vector<16x1xf32>
    %4 = arith.divf %2, %3 : vector<16x1xf32>
    %5 = vector.broadcast %4 : vector<16x1xf32> to vector<16x32xf32>
    %6 = arith.subf %0, %5 : vector<16x32xf32>
    %7 = arith.mulf %6, %6 : vector<16x32xf32>
    %cst_2 = arith.constant dense<0.000000e+00> : vector<16xf32>
    %8 = vector.multi_reduction <add>, %7, %cst_2 [1] : vector<16x32xf32> to vector<16xf32>
    %9 = vector.shape_cast %8 : vector<16xf32> to vector<16x1xf32>
    %cst_3 = arith.constant 3.200000e+01 : f32
    %10 = vector.broadcast %cst_3 : f32 to vector<16x1xf32>
    %11 = arith.divf %9, %10 : vector<16x1xf32>
    %cst_4 = arith.constant 9.99999974E-6 : f32
    %12 = vector.broadcast %cst_4 : f32 to vector<16x1xf32>
    %13 = arith.addf %11, %12 : vector<16x1xf32>
    %14 = math.rsqrt %13 : vector<16x1xf32>
    %15 = vector.broadcast %14 : vector<16x1xf32> to vector<16x32xf32>
    %16 = arith.mulf %6, %15 : vector<16x32xf32>
    %c0_5 = arith.constant 0 : index
    %c0_6 = arith.constant 0 : index
    %17 = vector.load %arg2[%c0_5, %c0_6] : memref<1x32xf32, #tpu.memory_space<vmem>>, vector<1x32xf32>
    %18 = vector.broadcast %17 : vector<1x32xf32> to vector<16x32xf32>
    %19 = arith.mulf %16, %18 : vector<16x32xf32>
    %c0_7 = arith.constant 0 : index
    %c0_8 = arith.constant 0 : index
    %20 = vector.load %arg3[%c0_7, %c0_8] : memref<1x32xf32, #tpu.memory_space<vmem>>, vector<1x32xf32>
    %21 = vector.broadcast %20 : vector<1x32xf32> to vector<16x32xf32>
    %22 = arith.addf %19, %21 : vector<16x32xf32>
    %c0_9 = arith.constant 0 : index
    %c0_10 = arith.constant 0 : index
    %23 = vector.load %arg6[%c0_9, %c0_10] : memref<16x32xf32, #tpu.memory_space<vmem>>, vector<16x32xf32>
    tpu.vector_store %arg6[%c0_9, %c0_10], %22 {strides = array<i32>} : memref<16x32xf32, #tpu.memory_space<vmem>>, vector<16x32xf32>,
    %24 = arith.truncf %22 : vector<16x32xf32> to vector<16x32xbf16>
    %c0_11 = arith.constant 0 : index
    %c0_12 = arith.constant 0 : index
    %25 = vector.load %arg4[%c0_11, %c0_12] : memref<32x96xbf16, #tpu.memory_space<vmem>>, vector<32x96xbf16>
    %cst_13 = arith.constant dense<0.000000e+00> : vector<16x96xf32>
    %26 = tpu.matmul %24, %25, %cst_13 {dimension_numbers = #tpu.dot_dimension_numbers<[1], [0], [0], [1], [0, 0, 1, 1], [], []>} : vector<16x32xbf16>, vector<32x96xbf16>, vector<16x96xf32> -> vector<16x96xf32>
    %c0_14 = arith.constant 0 : index
    %c0_15 = arith.constant 0 : index
    %27 = vector.load %arg5[%c0_14, %c0_15] : memref<1x96xf32, #tpu.memory_space<vmem>>, vector<1x96xf32>
    %28 = vector.broadcast %27 : vector<1x96xf32> to vector<16x96xf32>
    %29 = arith.addf %26, %28 : vector<16x96xf32>
    %c0_16 = arith.constant 0 : index
    %c0_17 = arith.constant 0 : index
    %30 = vector.load %arg7[%c0_16, %c0_17] : memref<16x96xf32, #tpu.memory_space<vmem>>, vector<16x96xf32>
    tpu.vector_store %arg7[%c0_16, %c0_17], %29 {strides = array<i32>} : memref<16x96xf32, #tpu.memory_space<vmem>>, vector<16x96xf32>,
    return
  }
  func.func @transform_0(%arg0: i32) -> (i32, i32) {
    %c0_i32 = arith.constant 0 : i32
    %c0_i32_0 = arith.constant 0 : i32
    return %arg0, %c0_i32 : i32, i32
  }
  func.func @transform_1(%arg0: i32) -> (i32, i32) {
    %c0_i32 = arith.constant 0 : i32
    %c0_i32_0 = arith.constant 0 : i32
    %c0_i32_1 = arith.constant 0 : i32
    return %c0_i32, %c0_i32_0 : i32, i32
  }
  func.func @transform_2(%arg0: i32) -> (i32, i32) {
    %c0_i32 = arith.constant 0 : i32
    %c0_i32_0 = arith.constant 0 : i32
    %c0_i32_1 = arith.constant 0 : i32
    return %c0_i32, %c0_i32_0 : i32, i32
  }
  func.func @transform_3(%arg0: i32) -> (i32, i32) {
    %c0_i32 = arith.constant 0 : i32
    %c0_i32_0 = arith.constant 0 : i32
    %c0_i32_1 = arith.constant 0 : i32
    return %c0_i32, %c0_i32_0 : i32, i32
  }
  func.func @transform_4(%arg0: i32) -> (i32, i32) {
    %c0_i32 = arith.constant 0 : i32
    %c0_i32_0 = arith.constant 0 : i32
    %c0_i32_1 = arith.constant 0 : i32
    return %c0_i32, %c0_i32_0 : i32, i32
  }
  func.func @transform_5(%arg0: i32) -> (i32, i32) {
    %c0_i32 = arith.constant 0 : i32
    %c0_i32_0 = arith.constant 0 : i32
    return %arg0, %c0_i32 : i32, i32
  }
  func.func @transform_6(%arg0: i32) -> (i32, i32) {
    %c0_i32 = arith.constant 0 : i32
    %c0_i32_0 = arith.constant 0 : i32
    return %arg0, %c0_i32 : i32, i32
  }
}

</mosaic_0001>

<llo_original>
// kernel: tpu_custom_call.1
$region0: #{tpu_custom_call.1}
  #allocation0 [shape = 'u32[]', space=smem, size = 0x4, offset = 0x4, fixed_abs, tag = 'smem constant byte address 0x4 - core index']
  #allocation1 [shape = 'u32[144,128]{1,0:T(1,128)}', space=vmem, size = 0x12000, scoped, tag = 'internal scratch']
  %s0 = inlined_call_operand.hbm [shape: f32[16,32], index: 0, kind: input, shape index: {}]
  %s1 = inlined_call_operand.vmem [shape: f32[1,32], index: 1, kind: input, shape index: {}]
  %s2 = inlined_call_operand.vmem [shape: f32[1,32], index: 2, kind: input, shape index: {}]
  %s3 = inlined_call_operand.hbm [shape: bf16[32,96], index: 3, kind: input, shape index: {}]
  %s4 = inlined_call_operand.vmem [shape: f32[1,96], index: 4, kind: input, shape index: {}]
  %s5 = inlined_call_operand.hbm [shape: f32[16,32], index: 5, kind: output, shape index: {0}]
  %s6 = inlined_call_operand.hbm [shape: f32[16,96], index: 6, kind: output, shape index: {1}]
  %7 = xla_tuple %s5, %s6
  %s8 = sld [smem:[#allocation0]]
  $region46: #{tpu_custom_call.1} parent=0
    _
  %s10 = ssub.s32 1, %s8
  %s11 = scalar_select 0, %s10, %s8
  $region1: #{tpu_custom_call.1} parent=0
    #allocation2 [shape = 'u8[8192]{0}', space=vmem, size = 0x2000, scoped, tag = 'input window, operand 0, single buffered']
    #allocation3 [shape = 's32[1]{0}', space=sflag, size = 0x4, scoped, tag = 'scoped memory for tpu_custom_call.1']
    #allocation4 [shape = 's32[1]{0}', space=sflag, size = 0x4, scoped, tag = 'scoped memory for tpu_custom_call.1']
    #allocation5 [shape = 'u8[8192]{0}', space=vmem, size = 0x2000, scoped, tag = 'input window, operand 3, single buffered']
    #allocation6 [shape = 's32[1]{0}', space=sflag, size = 0x4, scoped, tag = 'scoped memory for tpu_custom_call.1']
    #allocation7 [shape = 'u8[8192]{0}', space=vmem, size = 0x2000, scoped, tag = 'output window, operand 0, single buffered']
    #allocation8 [shape = 'u8[8192]{0}', space=vmem, size = 0x2000, scoped, tag = 'output window, operand 1, single buffered']
    #allocation9 [shape = 's32[1]{0}', space=sflag, size = 0x4, scoped, tag = 'scoped memory for tpu_custom_call.1']
    %12 = vsyncpa [#allocation3], 0
    %13 = vsyncpa [#allocation6], 0
    %14 = vsyncpa [#allocation4], 0
    %15 = vsyncpa [#allocation9], 0
    // Predicated region
    $region2: #{tpu_custom_call.1} parent=1 // pred_check
      _
    $region3: #{tpu_custom_call.1} parent=1 // pred_check_branch
      %17 = sbr.rel (0) target = $region5
    $region4: #{tpu_custom_call.1} parent=1 // pred_region
      %s19 = ssub.s32 256, 256
      %20 = vsyncadd [#allocation3], %s19
      %s21 = sshll.u32 [#allocation2], 4
      %s22 = int_to_ptr.vmem [resolvable:$true] %s21
      %27 = dma.hbm_to_vmem [thread:$0]  %s0, 256, %s22, [#allocation3], 128, 128, 8
    $region5: #{tpu_custom_call.1} parent=1 // pred_fallthru
      _
    // Predicated region
    $region6: #{tpu_custom_call.1} parent=1 // pred_check
      _
    $region7: #{tpu_custom_call.1} parent=1 // pred_check_branch
      %29 = sbr.rel (0) target = $region9
    $region8: #{tpu_custom_call.1} parent=1 // pred_region
      _
    $region9: #{tpu_custom_call.1} parent=1 // pred_fallthru
      _
    // Predicated region
    $region10: #{tpu_custom_call.1} parent=1 // pred_check
      _
    $region11: #{tpu_custom_call.1} parent=1 // pred_check_branch
      %31 = sbr.rel (0) target = $region13
    $region12: #{tpu_custom_call.1} parent=1 // pred_region
      _
    $region13: #{tpu_custom_call.1} parent=1 // pred_fallthru
      _
    // Predicated region
    $region14: #{tpu_custom_call.1} parent=1 // pred_check
      _
    $region15: #{tpu_custom_call.1} parent=1 // pred_check_branch
      %33 = sbr.rel (0) target = $region17
    $region16: #{tpu_custom_call.1} parent=1 // pred_region
      %s35 = ssub.s32 256, 256
      %36 = vsyncadd [#allocation6], %s35
      %s37 = sshll.u32 [#allocation5], 4
      %s38 = int_to_ptr.vmem [resolvable:$true] %s37
      %43 = dma.hbm_to_vmem [thread:$0]  %s3, 256, %s38, [#allocation6], 64, 64, 4
    $region17: #{tpu_custom_call.1} parent=1 // pred_fallthru
      _
    // Predicated region
    $region18: #{tpu_custom_call.1} parent=1 // pred_check
      _
    $region19: #{tpu_custom_call.1} parent=1 // pred_check_branch
      %45 = sbr.rel (0) target = $region21
    $region20: #{tpu_custom_call.1} parent=1 // pred_region
      _
    $region21: #{tpu_custom_call.1} parent=1 // pred_fallthru
      _
    // Predicated region
    $region22: #{tpu_custom_call.1} parent=1 // pred_check
      _
    $region23: #{tpu_custom_call.1} parent=1 // pred_check_branch
      %47 = sbr.rel (0) target = $region25
    $region24: #{tpu_custom_call.1} parent=1 // pred_region
      %48 = dma.done [#allocation3], 256
    $region25: #{tpu_custom_call.1} parent=1 // pred_fallthru
      _
    // Predicated region
    $region26: #{tpu_custom_call.1} parent=1 // pred_check
      _
    $region27: #{tpu_custom_call.1} parent=1 // pred_check_branch
      %50 = sbr.rel (0) target = $region29
    $region28: #{tpu_custom_call.1} parent=1 // pred_region
      %51 = dma.done [#allocation6], 256
    $region29: #{tpu_custom_call.1} parent=1 // pred_fallthru
      _
    %v53 = vld [vmem:[#allocation2] sm:$0xff]
    %v54 = vld [vmem:[#allocation2 + $0x8] sm:$0xff]
    %vm55 = vcmask 261120
    %v56 = vsel %vm55, %v53, 0.0
    %57 = vadd.xlane.f32.xlu0 %v56
    %v58 = vpop.xlane.xlu0 %57
    %v59 = vsel %vm55, %v54, 0.0
    %60 = vadd.xlane.f32.xlu0 %v59
    %v61 = vpop.xlane.xlu0 %60
    %v62 = vrcp.pop 32.0
    %v63 = vmul.f32 %v58, %v62
    %v64 = vmul.f32 %v61, %v62
    %v65 = vsub.f32 %v53, %v63
    %v66 = vsub.f32 %v54, %v64
    %v67 = vmul.f32 %v65, %v65
    %v68 = vmul.f32 %v66, %v66
    %v69 = vsel %vm55, %v67, 0.0
    %70 = vadd.xlane.f32.xlu0 %v69
    %v71 = vpop.xlane.xlu0 %70
    %v72 = vsel %vm55, %v68, 0.0
    %73 = vadd.xlane.f32.xlu0 %v72
    %v74 = vpop.xlane.xlu0 %73
    %v75 = vmul.f32 %v71, %v62
    %v76 = vmul.f32 %v74, %v62
    %v77 = vadd.f32 %v75, 1e-05
    %v78 = vadd.f32 %v76, 1e-05
    %v79 = vrsqrt.pop %v77
    %v80 = vrsqrt.pop %v78
    %v81 = vmul.f32 %v65, %v79
    %v82 = vmul.f32 %v66, %v80
    %v83 = vld [vmem:[%s1] sm:$0x1]
    %v85 = vlaneseq
    %v86 = vshrl.u32 %v85, 7
    %v87 = vsub.s32 0, %v86
    %v88 = vrot.slane %v83, %v87
    %v90 = vmul.f32 %v81, %v88
    %v91 = vmul.f32 %v82, %v88
    %v92 = vld [vmem:[%s2] sm:$0x1]
    %v94 = vlaneseq
    %v95 = vshrl.u32 %v94, 7
    %v96 = vsub.s32 0, %v95
    %v97 = vrot.slane %v92, %v96
    %v99 = vadd.f32 %v90, %v97
    %v100 = vadd.f32 %v91, %v97
    %101 = vst.msk [vmem:[#allocation7] sm:$0xff] %vm55, %v99
    %102 = vst.msk [vmem:[#allocation7 + $0x8] sm:$0xff] %vm55, %v100
    %v103 = vpack.c.bf16 %v100, %v99
    %v104 = vld [vmem:[#allocation5] sm:$0xf]
    %v105 = vld [vmem:[#allocation5 + $0x4] sm:$0xf]
    %v106 = vld [vmem:[#allocation5 + $0x8] sm:$0xf]
    %v107 = vld [vmem:[#allocation5 + $0xc] sm:$0xf]
    %v108 = vld [vmem:[%s4] sm:$0x1]
    %v110 = vlaneseq
    %v111 = vshrl.u32 %v110, 7
    %v112 = vsub.s32 0, %v111
    %v113 = vrot.slane %v108, %v112
    %v119 = vunpack.c.l.b16 %v104
    %v120 = vunpack.c.l.b16 %v105
    %v121 = vunpack.c.l.b16 %v106
    %v122 = vunpack.c.l.b16 %v107
    %v123 = vpack.c.b16 %v120, %v119
    %v124 = vpack.c.b16 %v122, %v121
    %v128 = vsel %vm55, %v103, 0
    %130 = vmatprep.subr.bf16.mxu0 0
    %131 = vmatpush1.bf16.msra.mxu0 0
    %132 = vmatprep.subr.bf16.mxu0 0
    %133 = vmatpush1.bf16.msra.mxu0 0
    %134 = vmatprep.subr.bf16.mxu0 0
    %135 = vmatpush1.bf16.msra.mxu0 0
    %136 = vmatprep.subr.bf16.mxu0 0
    %137 = vmatpush1.bf16.msra.mxu0 0
    %138 = vmatprep.subr.bf16.mxu0 0
    %139 = vmatpush1.bf16.msra.mxu0 0
    %140 = vmatprep.subr.bf16.mxu0 0
    %141 = vmatpush1.bf16.msra.mxu0 0
    %142 = vmatprep.subr.bf16.mxu0 0
    %143 = vmatpush1.bf16.msra.mxu0 %v124
    %144 = vmatprep.subr.bf16.mxu0 0
    %145 = vmatpush1.bf16.msra.mxu0 %v123
    %146 = vmatprep.subr.bf16.mxu0 0
    %147 = vmatpush2.bf16.msra.mxu0 0
    %148 = vmatprep.subr.bf16.mxu0 0
    %149 = vmatpush2.bf16.msra.mxu0 0
    %150 = vmatprep.subr.bf16.mxu0 0
    %151 = vmatpush2.bf16.msra.mxu0 0
    %152 = vmatprep.subr.bf16.mxu0 0
    %153 = vmatpush2.bf16.msra.mxu0 0
    %154 = vmatprep.subr.bf16.mxu0 0
    %155 = vmatpush2.bf16.msra.mxu0 0
    %156 = vmatprep.subr.bf16.mxu0 0
    %157 = vmatpush2.bf16.msra.mxu0 0
    %158 = vmatprep.subr.bf16.mxu0 0
    %159 = vmatpush2.bf16.msra.mxu0 0
    %160 = vmatprep.subr.bf16.mxu0 0
    %161 = vmatpush2.bf16.msra.mxu0 0
    %162 = vmatprep.mubr.bf16.mxu0 0
    %163 = vmatmul.mubr.bf16.gmra.mxu0 %v128
    %v164 = vpop.f32.mrf.mxu0
    %v165 = vadd.f32 %v113, %v164
    %v166 = vpop.f32.mrf.mxu0
    %v167 = vpop.f32.mrf.mxu0
    %v168 = vadd.f32 %v113, %v167
    %v169 = vpop.f32.mrf.mxu0
    %170 = vdwg.mxu0
    %vm171 = vcmask 785408
    %172 = vst.msk [vmem:[#allocation8] sm:$0xff] %vm171, %v165
    %173 = vst.msk [vmem:[#allocation8 + $0x8] sm:$0xff] %vm171, %v168
    // Predicated region
    $region30: #{tpu_custom_call.1} parent=1 // pred_check
      _
    $region31: #{tpu_custom_call.1} parent=1 // pred_check_branch
      %175 = sbr.rel (0) target = $region33
    $region32: #{tpu_custom_call.1} parent=1 // pred_region
      %s177 = ssub.s32 256, 256
      %178 = vsyncadd [#allocation4], %s177
      %s179 = sshll.u32 [#allocation7], 4
      %s180 = int_to_ptr.vmem [resolvable:$true] %s179
      %185 = dma.vmem_to_hbm [thread:$0]  %s180, 256, %s5, [#allocation4], 128, 128, 8
    $region33: #{tpu_custom_call.1} parent=1 // pred_fallthru
      _
    // Predicated region
    $region34: #{tpu_custom_call.1} parent=1 // pred_check
      _
    $region35: #{tpu_custom_call.1} parent=1 // pred_check_branch
      %187 = sbr.rel (0) target = $region37
    $region36: #{tpu_custom_call.1} parent=1 // pred_region
      %s189 = ssub.s32 256, 256
      %190 = vsyncadd [#allocation9], %s189
      %s191 = sshll.u32 [#allocation8], 4
      %s192 = int_to_ptr.vmem [resolvable:$true] %s191
      %197 = dma.vmem_to_hbm [thread:$0]  %s192, 256, %s6, [#allocation9], 128, 128, 8
    $region37: #{tpu_custom_call.1} parent=1 // pred_fallthru
      _
    // Predicated region
    $region38: #{tpu_custom_call.1} parent=1 // pred_check
      _
    $region39: #{tpu_custom_call.1} parent=1 // pred_check_branch
      %199 = sbr.rel (0) target = $region41
    $region40: #{tpu_custom_call.1} parent=1 // pred_region
      %200 = dma.done [#allocation4], 256
    $region41: #{tpu_custom_call.1} parent=1 // pred_fallthru
      _
    // Predicated region
    $region42: #{tpu_custom_call.1} parent=1 // pred_check
      _
    $region43: #{tpu_custom_call.1} parent=1 // pred_check_branch
      %202 = sbr.rel (0) target = $region45
    $region44: #{tpu_custom_call.1} parent=1 // pred_region
      %203 = dma.done [#allocation9], 256
    $region45: #{tpu_custom_call.1} parent=1 // pred_fallthru
      _
    %204 = vsyncpa [#allocation3], 1
    %205 = vsyncpa [#allocation6], 1
    %206 = vsyncpa [#allocation4], 1
    %207 = vsyncpa [#allocation9], 1

</llo_original>
